<compile_context>
chip_gen: v6e
topology: v6e:2x2x1
jax: 0.10.0
libtpu: 0.0.40
codegen_flags: <defaults>
</compile_context>

<pallas_src>
import functools

import jax
import jax.numpy as jnp
import numpy as np
from jax.experimental import pallas as pl
from jax.experimental.pallas import tpu as pltpu


def _coordconv_bn_relu_kernel(p_ref, w_ref, cb_ref, gb_ref, o_ref, *, eps):
    # p_ref : (K*K*Cin, M)  transposed im2col of the data channels, M = N*Ho*Wo
    # w_ref : (Cout, K*K*Cin)   conv weights for the data channels (transposed)
    # cb_ref: (Cout, M)         precomputed coordinate-channel contribution
    # gb_ref: (Cout, 2)         packed [gamma, beta]
    # o_ref : (Cout, M)         lane-dense output
    M = o_ref.shape[1]

    # --- data-channel contraction: single MXU push/drain ---------------------
    acc = jnp.dot(w_ref[...], p_ref[...], preferred_element_type=jnp.float32)
    # Coordinate channels were contracted exactly in the wrapper (input-
    # independent), so here it is just one lane-dense add.
    acc = acc + cb_ref[...]
    # (conv bias intentionally omitted: cancelled exactly by training-mode BN)

    # --- BatchNorm2d folded into per-channel scale/shift + ReLU --------------
    inv_m = jnp.float32(1.0 / M)
    mean = jnp.sum(acc, axis=1, keepdims=True) * inv_m            # (Cout, 1)
    ex2 = jnp.sum(acc * acc, axis=1, keepdims=True) * inv_m       # (Cout, 1)
    var = jnp.maximum(ex2 - mean * mean, 0.0)                     # clamp vs cancellation
    g = gb_ref[:, 0:1]
    b = gb_ref[:, 1:2]
    scale = g * jax.lax.rsqrt(var + eps)                          # (Cout, 1)
    shift = b - mean * scale                                      # (Cout, 1)
    o_ref[...] = jnp.maximum(acc * scale + shift, 0.0)


def _coord_patch_matrix(H, W, K):
    """Pc[(ky*K+kx)*3 + c, ho*Wo + wo] = coord channel c at input pixel (ho+ky, wo+kx).

    Same convention as the reference below: xx varies along H, yy along W,
    values in [-1, 1]; rr = sqrt((xx-0.5)^2 + (yy-0.5)^2).
    NOTE: canonical PyTorch AddCoords has xx varying along width; this matches
    the in-file reference.  (H==1 or W==1 would divide by zero — same
    limitation as the reference CoordConv.)
    """
    Ho, Wo = H - K + 1, W - K + 1
    ii = np.arange(H, dtype=np.float32)
    jj = np.arange(W, dtype=np.float32)
    xx = np.broadcast_to((2.0 * ii / (H - 1.0) - 1.0)[:, None], (H, W))
    yy = np.broadcast_to((2.0 * jj / (W - 1.0) - 1.0)[None, :], (H, W))
    rr = np.sqrt((xx - 0.5) ** 2 + (yy - 0.5) ** 2)
    coords = np.stack([xx, yy, rr], axis=-1)                       # (H, W, 3)
    taps = [coords[ky:ky + Ho, kx:kx + Wo, :]                      # (Ho, Wo, 3)
            for ky in range(K) for kx in range(K)]
    pc = np.stack(taps, axis=0)                                    # (K*K, Ho, Wo, 3)
    pc = np.transpose(pc, (0, 3, 1, 2)).reshape(K * K * 3, Ho * Wo)
    return np.ascontiguousarray(pc, dtype=np.float32)


def block_forward(x_nchw, w, conv_b, gamma, beta, *, k_size=3, eps=1e-5):
    """Forward pass of Block(in_channels, out_channels, k_size=3, pool=False).

    `conv_b` is accepted for interface parity but not used: under training-mode
    BatchNorm the per-channel conv bias is removed by the mean subtraction and
    cancels in the variance, so dropping it is exact (and saves a DMA + a full
    VALU pass over the accumulator).
    """
    del conv_b
    N, Cin, H, W = x_nchw.shape
    K = k_size
    Ho, Wo = H - K + 1, W - K + 1
    Q = Ho * Wo
    M = N * Q
    Ca = w.shape[2]
    Cout = w.shape[-1]
    assert Ca == Cin + 3, "weights must cover Cin data channels + 3 coord channels"

    x_nhwc = jnp.transpose(x_nchw, (0, 2, 3, 1)).astype(jnp.float32)

    # Transposed im2col of the data channels only.  Pure layout plumbing so the
    # kernel sees clean 2-D lane-dense matmul operands.
    # Row = (ky*K + kx)*Cin + cin ; column = n*Q + ho*Wo + wo.
    cols = [x_nhwc[:, ky:ky + Ho, kx:kx + Wo, :]
            for ky in range(K) for kx in range(K)]                 # each (N,Ho,Wo,Cin)
    patches = jnp.stack(cols, axis=0)                              # (K*K, N, Ho, Wo, Cin)
    p_T = jnp.transpose(patches, (0, 4, 1, 2, 3)).reshape(K * K * Cin, M)

    wx_T = w[:, :, :Cin, :].reshape(K * K * Cin, Cout).T.astype(jnp.float32)  # (Cout, K*K*Cin)
    wc_T = w[:, :, Cin:, :].reshape(K * K * 3, Cout).T.astype(jnp.float32)    # (Cout, K*K*3)

    # Coordinate-channel contribution: input independent, so contract it once
    # (exactly) in the wrapper and tile across the batch.  Columns match p_T
    # (column = n*Q + q), so a contiguous tile along axis 1 is correct.
    pc = jnp.asarray(_coord_patch_matrix(H, W, K))                            # (K*K*3, Q)
    cb_q = jnp.dot(wc_T, pc, precision=jax.lax.Precision.HIGHEST)             # (Cout, Q)
    coord_bias = jnp.tile(cb_q, (1, N))                                       # (Cout, M)

    gb = jnp.stack([gamma, beta], axis=1).astype(jnp.float32)                 # (Cout, 2)

    kernel = functools.partial(_coordconv_bn_relu_kernel, eps=eps)
    out2d = pl.pallas_call(
        kernel,
        out_shape=jax.ShapeDtypeStruct((Cout, M), jnp.float32),
        grid=(1,),
        in_specs=[
            pl.BlockSpec((K * K * Cin, M), lambda i: (0, 0)),
            pl.BlockSpec((Cout, K * K * Cin), lambda i: (0, 0)),
            pl.BlockSpec((Cout, M), lambda i: (0, 0)),
            pl.BlockSpec((Cout, 2), lambda i: (0, 0)),
        ],
        out_specs=pl.BlockSpec((Cout, M), lambda i: (0, 0)),
        compiler_params=pltpu.CompilerParams(dimension_semantics=("arbitrary",)),
    )(p_T, wx_T, coord_bias, gb)

    # (Cout, M) -> (Cout, N, Ho, Wo) -> NCHW.
    return jnp.transpose(out2d.reshape(Cout, N, Ho, Wo), (1, 0, 2, 3))


# ----------------------------- pure-JAX reference -----------------------------
def add_coords_with_r(x_nhwc):
    """AddCoords(with_r=True): append xx, yy, rr channels."""
    N, H, W, _ = x_nhwc.shape
    ii = jnp.arange(H, dtype=jnp.float32)
    jj = jnp.arange(W, dtype=jnp.float32)
    xx = (2.0 * ii / (H - 1.0) - 1.0)[:, None] * jnp.ones((1, W), jnp.float32)
    yy = (2.0 * jj / (W - 1.0) - 1.0)[None, :] * jnp.ones((H, 1), jnp.float32)
    rr = jnp.sqrt((xx - 0.5) ** 2 + (yy - 0.5) ** 2)
    coords = jnp.broadcast_to(jnp.stack([xx, yy, rr], axis=-1), (N, H, W, 3))
    return jnp.concatenate([x_nhwc, coords.astype(x_nhwc.dtype)], axis=-1)


def reference_forward(x_nchw, w, conv_b, gamma, beta, *, k_size=3, eps=1e-5):
    """Reference: CoordConv(with bias) -> BatchNorm2d(training) -> ReLU."""
    x_aug = add_coords_with_r(jnp.transpose(x_nchw, (0, 2, 3, 1)))
    N, H, W, Ca = x_aug.shape
    Cout = w.shape[-1]
    Ho, Wo = H - k_size + 1, W - k_size + 1
    acc = jnp.zeros((N, Ho, Wo, Cout), jnp.float32)
    for ky in range(k_size):
        for kx in range(k_size):
            patch = x_aug[:, ky:ky + Ho, kx:kx + Wo, :]
            acc = acc + jnp.einsum("nhwc,co->nhwo", patch, w[ky, kx],
                                   precision="highest")
    acc = acc + conv_b   # kept in the reference; cancelled by BN below
    mean = acc.mean(axis=(0, 1, 2), keepdims=True)
    var = ((acc - mean) ** 2).mean(axis=(0, 1, 2), keepdims=True)
    y = (acc - mean) * jax.lax.rsqrt(var + eps) * gamma + beta
    return jnp.transpose(jnp.maximum(y, 0.0), (0, 3, 1, 2))


if __name__ == "__main__":
    # Small shapes: batch=2, in_channels=4, spatial=16x16, out_channels=8, k=3.
    N, Cin, H, W = 2, 4, 16, 16
    Cout, K = 8, 3
    Ca = Cin + 3  # CoordConv with_r=True adds xx, yy, rr channels

    key = jax.random.PRNGKey(0)
    kx_, kw_, kb_, kg_, kbeta_ = jax.random.split(key, 5)

    fan_in = Ca * K * K
    bound = 1.0 / np.sqrt(fan_in)
    w = jax.random.uniform(kw_, (K, K, Ca, Cout), jnp.float32, -bound, bound)   # HWIO
    conv_b = jax.random.uniform(kb_, (Cout,), jnp.float32, -bound, bound)
    gamma = 1.0 + 0.1 * jax.random.normal(kg_, (Cout,), jnp.float32)
    beta = 0.1 * jax.random.normal(kbeta_, (Cout,), jnp.float32)

    x = jax.random.normal(kx_, (N, Cin, H, W), jnp.float32)   # PyTorch-style NCHW

    out = block_forward(x, w, conv_b, gamma, beta, k_size=K)
    out = jax.block_until_ready(out)

    ref = reference_forward(x, w, conv_b, gamma, beta, k_size=K)
    # Tolerance is slightly loose because the in-kernel f32 contraction uses the
    # MXU's default (reduced-precision multi-pass) arithmetic; the coordinate
    # contribution is now exact, so the observed error should be well below
    # this.  Structural errors (wrong taps / coords / BN) would be O(0.1 - 1).
    np.testing.assert_allclose(np.asarray(out), np.asarray(ref), atol=1e-2, rtol=1e-2)
    assert out.shape == (N, Cout, H - K + 1, W - K + 1)

    print("KERNEL_OK")
</pallas_src>

<mosaic_0001>
module attributes {stable_mosaic.version = 11 : i64} {
  func.func @_coordconv_bn_relu_kernel(%arg0: i32, %arg1: memref<36x392xf32, #tpu.memory_space<vmem>>, %arg2: memref<8x36xf32, #tpu.memory_space<vmem>>, %arg3: memref<8x392xf32, #tpu.memory_space<vmem>>, %arg4: memref<8x2xf32, #tpu.memory_space<vmem>>, %arg5: memref<8x392xf32, #tpu.memory_space<vmem>>) attributes {dimension_semantics = [#tpu.dimension_semantics<arbitrary>], iteration_bounds = array<i64: 1>, scalar_prefetch = 0 : i64, scratch_operands = 0 : i64, tpu.core_type = #tpu.core_type<tc>, window_params = [{pipeline_mode = #tpu.pipeline_mode<synchronous>, transform_indices = @transform_0, window_bounds = array<i64: 36, 392>}, {pipeline_mode = #tpu.pipeline_mode<synchronous>, transform_indices = @transform_1, window_bounds = array<i64: 8, 36>}, {pipeline_mode = #tpu.pipeline_mode<synchronous>, transform_indices = @transform_2, window_bounds = array<i64: 8, 392>}, {pipeline_mode = #tpu.pipeline_mode<synchronous>, transform_indices = @transform_3, window_bounds = array<i64: 8, 2>}, {pipeline_mode = #tpu.pipeline_mode<synchronous>, transform_indices = @transform_4, window_bounds = array<i64: 8, 392>}]} {
    %c0 = arith.constant 0 : index
    %c0_0 = arith.constant 0 : index
    %0 = vector.load %arg2[%c0, %c0_0] : memref<8x36xf32, #tpu.memory_space<vmem>>, vector<8x36xf32>
    %c0_1 = arith.constant 0 : index
    %c0_2 = arith.constant 0 : index
    %1 = vector.load %arg1[%c0_1, %c0_2] : memref<36x392xf32, #tpu.memory_space<vmem>>, vector<36x392xf32>
    %cst = arith.constant dense<0.000000e+00> : vector<8x392xf32>
    %2 = tpu.matmul %0, %1, %cst {dimension_numbers = #tpu.dot_dimension_numbers<[1], [0], [0], [1], [0, 0, 1, 1], [], []>} : vector<8x36xf32>, vector<36x392xf32>, vector<8x392xf32> -> vector<8x392xf32>
    %c0_3 = arith.constant 0 : index
    %c0_4 = arith.constant 0 : index
    %3 = vector.load %arg3[%c0_3, %c0_4] : memref<8x392xf32, #tpu.memory_space<vmem>>, vector<8x392xf32>
    %4 = arith.addf %2, %3 : vector<8x392xf32>
    %cst_5 = arith.constant dense<0.000000e+00> : vector<8xf32>
    %5 = vector.multi_reduction <add>, %4, %cst_5 [1] : vector<8x392xf32> to vector<8xf32>
    %6 = vector.shape_cast %5 : vector<8xf32> to vector<8x1xf32>
    %cst_6 = arith.constant 0.00255102036 : f32
    %7 = vector.broadcast %cst_6 : f32 to vector<8x1xf32>
    %8 = arith.mulf %6, %7 : vector<8x1xf32>
    %9 = arith.mulf %4, %4 : vector<8x392xf32>
    %cst_7 = arith.constant dense<0.000000e+00> : vector<8xf32>
    %10 = vector.multi_reduction <add>, %9, %cst_7 [1] : vector<8x392xf32> to vector<8xf32>
    %11 = vector.shape_cast %10 : vector<8xf32> to vector<8x1xf32>
    %cst_8 = arith.constant 0.00255102036 : f32
    %12 = vector.broadcast %cst_8 : f32 to vector<8x1xf32>
    %13 = arith.mulf %11, %12 : vector<8x1xf32>
    %14 = arith.mulf %8, %8 : vector<8x1xf32>
    %15 = arith.subf %13, %14 : vector<8x1xf32>
    %cst_9 = arith.constant 0.000000e+00 : f32
    %16 = vector.broadcast %cst_9 : f32 to vector<8x1xf32>
    %17 = arith.maximumf %15, %16 : vector<8x1xf32>
    %c0_10 = arith.constant 0 : index
    %c0_11 = arith.constant 0 : index
    %18 = vector.load %arg4[%c0_10, %c0_11] : memref<8x2xf32, #tpu.memory_space<vmem>>, vector<8x1xf32>
    %c0_12 = arith.constant 0 : index
    %c1 = arith.constant 1 : index
    %19 = vector.load %arg4[%c0_12, %c1] : memref<8x2xf32, #tpu.memory_space<vmem>>, vector<8x1xf32>
    %cst_13 = arith.constant 9.99999974E-6 : f32
    %20 = vector.broadcast %cst_13 : f32 to vector<8x1xf32>
    %21 = arith.addf %17, %20 : vector<8x1xf32>
    %22 = math.rsqrt %21 : vector<8x1xf32>
    %23 = arith.mulf %18, %22 : vector<8x1xf32>
    %24 = arith.mulf %8, %23 : vector<8x1xf32>
    %25 = arith.subf %19, %24 : vector<8x1xf32>
    %26 = vector.broadcast %23 : vector<8x1xf32> to vector<8x392xf32>
    %27 = arith.mulf %4, %26 : vector<8x392xf32>
    %28 = vector.broadcast %25 : vector<8x1xf32> to vector<8x392xf32>
    %29 = arith.addf %27, %28 : vector<8x392xf32>
    %cst_14 = arith.constant 0.000000e+00 : f32
    %30 = vector.broadcast %cst_14 : f32 to vector<8x392xf32>
    %31 = arith.maximumf %29, %30 : vector<8x392xf32>
    %c0_15 = arith.constant 0 : index
    %c0_16 = arith.constant 0 : index
    %32 = vector.load %arg5[%c0_15, %c0_16] : memref<8x392xf32, #tpu.memory_space<vmem>>, vector<8x392xf32>
    tpu.vector_store %arg5[%c0_15, %c0_16], %31 {strides = array<i32>} : memref<8x392xf32, #tpu.memory_space<vmem>>, vector<8x392xf32>,
    return
  }
  func.func @transform_0(%arg0: i32) -> (i32, i32) {
    %c0_i32 = arith.constant 0 : i32
    %c0_i32_0 = arith.constant 0 : i32
    %c0_i32_1 = arith.constant 0 : i32
    return %c0_i32, %c0_i32_0 : i32, i32
  }
  func.func @transform_1(%arg0: i32) -> (i32, i32) {
    %c0_i32 = arith.constant 0 : i32
    %c0_i32_0 = arith.constant 0 : i32
    %c0_i32_1 = arith.constant 0 : i32
    return %c0_i32, %c0_i32_0 : i32, i32
  }
  func.func @transform_2(%arg0: i32) -> (i32, i32) {
    %c0_i32 = arith.constant 0 : i32
    %c0_i32_0 = arith.constant 0 : i32
    %c0_i32_1 = arith.constant 0 : i32
    return %c0_i32, %c0_i32_0 : i32, i32
  }
  func.func @transform_3(%arg0: i32) -> (i32, i32) {
    %c0_i32 = arith.constant 0 : i32
    %c0_i32_0 = arith.constant 0 : i32
    %c0_i32_1 = arith.constant 0 : i32
    return %c0_i32, %c0_i32_0 : i32, i32
  }
  func.func @transform_4(%arg0: i32) -> (i32, i32) {
    %c0_i32 = arith.constant 0 : i32
    %c0_i32_0 = arith.constant 0 : i32
    %c0_i32_1 = arith.constant 0 : i32
    return %c0_i32, %c0_i32_0 : i32, i32
  }
}

</mosaic_0001>

<llo_original>
// kernel: tpu_custom_call.1
$region0: #{tpu_custom_call.1}
  #allocation0 [shape = 'u32[]', space=smem, size = 0x4, offset = 0x4, fixed_abs, tag = 'smem constant byte address 0x4 - core index']
  #allocation1 [shape = 'u32[144,128]{1,0:T(1,128)}', space=vmem, size = 0x12000, scoped, tag = 'internal scratch']
  %s0 = inlined_call_operand.hbm [shape: f32[36,392], index: 0, kind: input, shape index: {}]
  %s1 = inlined_call_operand.vmem [shape: f32[8,36], index: 1, kind: input, shape index: {}]
  %s2 = inlined_call_operand.hbm [shape: f32[8,392], index: 2, kind: input, shape index: {}]
  %s3 = inlined_call_operand.vmem [shape: f32[8,2], index: 3, kind: input, shape index: {}]
  %s4 = inlined_call_operand.hbm [shape: f32[8,392], index: 4, kind: output, shape index: {}]
  %s5 = sld [smem:[#allocation0]]
  $region34: #{tpu_custom_call.1} parent=0
    _
  %s7 = ssub.s32 1, %s5
  %s8 = scalar_select 0, %s7, %s5
  $region1: #{tpu_custom_call.1} parent=0
    #allocation2 [shape = 'u8[81920]{0}', space=vmem, size = 0x14000, scoped, tag = 'input window, operand 0, single buffered']
    #allocation3 [shape = 's32[1]{0}', space=sflag, size = 0x4, scoped, tag = 'scoped memory for tpu_custom_call.1']
    #allocation4 [shape = 's32[1]{0}', space=sflag, size = 0x4, scoped, tag = 'scoped memory for tpu_custom_call.1']
    #allocation5 [shape = 'u8[16384]{0}', space=vmem, size = 0x4000, scoped, tag = 'input window, operand 2, single buffered']
    #allocation6 [shape = 's32[1]{0}', space=sflag, size = 0x4, scoped, tag = 'scoped memory for tpu_custom_call.1']
    #allocation7 [shape = 'u8[16384]{0}', space=vmem, size = 0x4000, scoped, tag = 'output window, operand 0, single buffered']
    %9 = vsyncpa [#allocation3], 0
    %10 = vsyncpa [#allocation6], 0
    %11 = vsyncpa [#allocation4], 0
    // Predicated region
    $region2: #{tpu_custom_call.1} parent=1 // pred_check
      _
    $region3: #{tpu_custom_call.1} parent=1 // pred_check_branch
      %13 = sbr.rel (0) target = $region5
    $region4: #{tpu_custom_call.1} parent=1 // pred_region
      %s15 = ssub.s32 2560, 2560
      %16 = vsyncadd [#allocation3], %s15
      %s17 = sshll.u32 [#allocation2], 4
      %s18 = int_to_ptr.vmem [resolvable:$true] %s17
      %23 = dma.hbm_to_vmem [thread:$0]  %s0, 2560, %s18, [#allocation3], 512, 512, 32
    $region5: #{tpu_custom_call.1} parent=1 // pred_fallthru
      _
    // Predicated region
    $region6: #{tpu_custom_call.1} parent=1 // pred_check
      _
    $region7: #{tpu_custom_call.1} parent=1 // pred_check_branch
      %25 = sbr.rel (0) target = $region9
    $region8: #{tpu_custom_call.1} parent=1 // pred_region
      _
    $region9: #{tpu_custom_call.1} parent=1 // pred_fallthru
      _
    // Predicated region
    $region10: #{tpu_custom_call.1} parent=1 // pred_check
      _
    $region11: #{tpu_custom_call.1} parent=1 // pred_check_branch
      %27 = sbr.rel (0) target = $region13
    $region12: #{tpu_custom_call.1} parent=1 // pred_region
      %s29 = ssub.s32 512, 512
      %30 = vsyncadd [#allocation6], %s29
      %s32 = sshll.u32 [#allocation5], 4
      %s33 = int_to_ptr.vmem [resolvable:$true] %s32
      %35 = dma.hbm_to_vmem [thread:$0]  %s2, 512, %s33, [#allocation6]
    $region13: #{tpu_custom_call.1} parent=1 // pred_fallthru
      _
    // Predicated region
    $region14: #{tpu_custom_call.1} parent=1 // pred_check
      _
    $region15: #{tpu_custom_call.1} parent=1 // pred_check_branch
      %37 = sbr.rel (0) target = $region17
    $region16: #{tpu_custom_call.1} parent=1 // pred_region
      _
    $region17: #{tpu_custom_call.1} parent=1 // pred_fallthru
      _
    // Predicated region
    $region18: #{tpu_custom_call.1} parent=1 // pred_check
      _
    $region19: #{tpu_custom_call.1} parent=1 // pred_check_branch
      %39 = sbr.rel (0) target = $region21
    $region20: #{tpu_custom_call.1} parent=1 // pred_region
      %40 = dma.done [#allocation3], 2560
    $region21: #{tpu_custom_call.1} parent=1 // pred_fallthru
      _
    // Predicated region
    $region22: #{tpu_custom_call.1} parent=1 // pred_check
      _
    $region23: #{tpu_custom_call.1} parent=1 // pred_check_branch
      %42 = sbr.rel (0) target = $region25
    $region24: #{tpu_custom_call.1} parent=1 // pred_region
      %43 = dma.done [#allocation6], 512
    $region25: #{tpu_custom_call.1} parent=1 // pred_fallthru
      _
    %v44 = vld [vmem:[%s1] sm:$0xff]
    %v45 = vld [vmem:[#allocation2] sm:$0xff]
    %v46 = vld [vmem:[#allocation2 + $0x8] sm:$0xff]
    %v47 = vld [vmem:[#allocation2 + $0x10] sm:$0xff]
    %v48 = vld [vmem:[#allocation2 + $0x18] sm:$0xff]
    %v49 = vld [vmem:[#allocation2 + $0x20] sm:$0xff]
    %v50 = vld [vmem:[#allocation2 + $0x28] sm:$0xff]
    %v51 = vld [vmem:[#allocation2 + $0x30] sm:$0xff]
    %v52 = vld [vmem:[#allocation2 + $0x38] sm:$0xff]
    %v53 = vld [vmem:[#allocation2 + $0x40] sm:$0xff]
    %v54 = vld [vmem:[#allocation2 + $0x48] sm:$0xff]
    %v55 = vld [vmem:[#allocation2 + $0x50] sm:$0xff]
    %v56 = vld [vmem:[#allocation2 + $0x58] sm:$0xff]
    %v57 = vld [vmem:[#allocation2 + $0x60] sm:$0xff]
    %v58 = vld [vmem:[#allocation2 + $0x68] sm:$0xff]
    %v59 = vld [vmem:[#allocation2 + $0x70] sm:$0xff]
    %v60 = vld [vmem:[#allocation2 + $0x78] sm:$0xff]
    %v61 = vld [vmem:[#allocation2 + $0x80] sm:$0xf]
    %v62 = vld [vmem:[#allocation2 + $0x88] sm:$0xf]
    %v63 = vld [vmem:[#allocation2 + $0x90] sm:$0xf]
    %v64 = vld [vmem:[#allocation2 + $0x98] sm:$0xf]
    %v65 = vld [vmem:[#allocation5] sm:$0xff]
    %v66 = vld [vmem:[#allocation5 + $0x8] sm:$0xff]
    %v67 = vld [vmem:[#allocation5 + $0x10] sm:$0xff]
    %v68 = vld [vmem:[#allocation5 + $0x18] sm:$0xff]
    %vm69 = vcmask 293888
    %v71 = vsel %vm69, %v44, 0
    %vm73 = vcmask 1043456
    %v75 = vsel %vm73, %v61, 0
    %v78 = vsel %vm73, %v62, 0
    %v81 = vsel %vm73, %v63, 0
    %v84 = vsel %vm73, %v64, 0
    %86 = vmatprep.subr.mxu0 0.0
    %87 = vmatpush1.msra.mxu0 0.0
    %88 = vmatprep.subr.mxu0 0.0
    %89 = vmatpush1.msra.mxu0 0.0
    %90 = vmatprep.subr.mxu0 0.0
    %91 = vmatpush1.msra.mxu0 0.0
    %92 = vmatprep.subr.mxu0 0.0
    %93 = vmatpush1.msra.mxu0 0.0
    %94 = vmatprep.subr.mxu0 0.0
    %95 = vmatpush1.msra.mxu0 0.0
    %96 = vmatprep.subr.mxu0 0.0
    %97 = vmatpush1.msra.mxu0 0.0
    %98 = vmatprep.subr.mxu0 0.0
    %99 = vmatpush1.msra.mxu0 0.0
    %100 = vmatprep.subr.mxu0 0.0
    %101 = vmatpush1.msra.mxu0 0.0
    %102 = vmatprep.subr.mxu0 0.0
    %103 = vmatpush1.msra.mxu0 0.0
    %104 = vmatprep.subr.mxu0 0.0
    %105 = vmatpush1.msra.mxu0 0.0
    %106 = vmatprep.subr.mxu0 0.0
    %107 = vmatpush1.msra.mxu0 0.0
    %108 = vmatprep.subr.mxu0 %v78
    %109 = vmatpush1.msra.mxu0 %v75
    %110 = vmatprep.subr.mxu0 %v58
    %111 = vmatpush1.msra.mxu0 %v57
    %112 = vmatprep.subr.mxu0 %v54
    %113 = vmatpush1.msra.mxu0 %v53
    %114 = vmatprep.subr.mxu0 %v50
    %115 = vmatpush1.msra.mxu0 %v49
    %116 = vmatprep.subr.mxu0 %v46
    %117 = vmatpush1.msra.mxu0 %v45
    %118 = vmatprep.subr.mxu0 0.0
    %119 = vmatpush2.msra.mxu0 0.0
    %120 = vmatprep.subr.mxu0 0.0
    %121 = vmatpush2.msra.mxu0 0.0
    %122 = vmatprep.subr.mxu0 0.0
    %123 = vmatpush2.msra.mxu0 0.0
    %124 = vmatprep.subr.mxu0 0.0
    %125 = vmatpush2.msra.mxu0 0.0
    %126 = vmatprep.subr.mxu0 0.0
    %127 = vmatpush2.msra.mxu0 0.0
    %128 = vmatprep.subr.mxu0 0.0
    %129 = vmatpush2.msra.mxu0 0.0
    %130 = vmatprep.subr.mxu0 0.0
    %131 = vmatpush2.msra.mxu0 0.0
    %132 = vmatprep.subr.mxu0 0.0
    %133 = vmatpush2.msra.mxu0 0.0
    %134 = vmatprep.subr.mxu0 0.0
    %135 = vmatpush2.msra.mxu0 0.0
    %136 = vmatprep.subr.mxu0 0.0
    %137 = vmatpush2.msra.mxu0 0.0
    %138 = vmatprep.subr.mxu0 0.0
    %139 = vmatpush2.msra.mxu0 0.0
    %140 = vmatprep.subr.mxu0 0.0
    %141 = vmatpush2.msra.mxu0 0.0
    %142 = vmatprep.subr.mxu0 0.0
    %143 = vmatpush2.msra.mxu0 0.0
    %144 = vmatprep.subr.mxu0 0.0
    %145 = vmatpush2.msra.mxu0 0.0
    %146 = vmatprep.subr.mxu0 0.0
    %147 = vmatpush2.msra.mxu0 0.0
    %148 = vmatprep.subr.mxu0 0.0
    %149 = vmatpush2.msra.mxu0 0.0
    %150 = vmatprep.mubr.f32.mxu0 0.0
    %151 = vmatmul.mubr.f32.gmra.mxu0 %v71
    %v152 = vpop.f32.mrf.mxu0
    %v153 = vadd.f32 %v65, %v152
    %v154 = vpop.f32.mrf.mxu0
    %v155 = vadd.f32 %v66, %v154
    %156 = vdwg.mxu0
    %157 = vmatprep.subr.mxu0 0.0
    %158 = vmatpush1.msra.mxu0 0.0
    %159 = vmatprep.subr.mxu0 0.0
    %160 = vmatpush1.msra.mxu0 0.0
    %161 = vmatprep.subr.mxu0 0.0
    %162 = vmatpush1.msra.mxu0 0.0
    %163 = vmatprep.subr.mxu0 0.0
    %164 = vmatpush1.msra.mxu0 0.0
    %165 = vmatprep.subr.mxu0 0.0
    %166 = vmatpush1.msra.mxu0 0.0
    %167 = vmatprep.subr.mxu0 0.0
    %168 = vmatpush1.msra.mxu0 0.0
    %169 = vmatprep.subr.mxu0 0.0
    %170 = vmatpush1.msra.mxu0 0.0
    %171 = vmatprep.subr.mxu0 0.0
    %172 = vmatpush1.msra.mxu0 0.0
    %173 = vmatprep.subr.mxu0 0.0
    %174 = vmatpush1.msra.mxu0 0.0
    %175 = vmatprep.subr.mxu0 0.0
    %176 = vmatpush1.msra.mxu0 0.0
    %177 = vmatprep.subr.mxu0 0.0
    %178 = vmatpush1.msra.mxu0 0.0
    %179 = vmatprep.subr.mxu0 %v84
    %180 = vmatpush1.msra.mxu0 %v81
    %181 = vmatprep.subr.mxu0 %v60
    %182 = vmatpush1.msra.mxu0 %v59
    %183 = vmatprep.subr.mxu0 %v56
    %184 = vmatpush1.msra.mxu0 %v55
    %185 = vmatprep.subr.mxu0 %v52
    %186 = vmatpush1.msra.mxu0 %v51
    %187 = vmatprep.subr.mxu0 %v48
    %188 = vmatpush1.msra.mxu0 %v47
    %189 = vmatprep.subr.mxu0 0.0
    %190 = vmatpush2.msra.mxu0 0.0
    %191 = vmatprep.subr.mxu0 0.0
    %192 = vmatpush2.msra.mxu0 0.0
    %193 = vmatprep.subr.mxu0 0.0
    %194 = vmatpush2.msra.mxu0 0.0
    %195 = vmatprep.subr.mxu0 0.0
    %196 = vmatpush2.msra.mxu0 0.0
    %197 = vmatprep.subr.mxu0 0.0
    %198 = vmatpush2.msra.mxu0 0.0
    %199 = vmatprep.subr.mxu0 0.0
    %200 = vmatpush2.msra.mxu0 0.0
    %201 = vmatprep.subr.mxu0 0.0
    %202 = vmatpush2.msra.mxu0 0.0
    %203 = vmatprep.subr.mxu0 0.0
    %204 = vmatpush2.msra.mxu0 0.0
    %205 = vmatprep.subr.mxu0 0.0
    %206 = vmatpush2.msra.mxu0 0.0
    %207 = vmatprep.subr.mxu0 0.0
    %208 = vmatpush2.msra.mxu0 0.0
    %209 = vmatprep.subr.mxu0 0.0
    %210 = vmatpush2.msra.mxu0 0.0
    %211 = vmatprep.subr.mxu0 0.0
    %212 = vmatpush2.msra.mxu0 0.0
    %213 = vmatprep.subr.mxu0 0.0
    %214 = vmatpush2.msra.mxu0 0.0
    %215 = vmatprep.subr.mxu0 0.0
    %216 = vmatpush2.msra.mxu0 0.0
    %217 = vmatprep.subr.mxu0 0.0
    %218 = vmatpush2.msra.mxu0 0.0
    %219 = vmatprep.subr.mxu0 0.0
    %220 = vmatpush2.msra.mxu0 0.0
    %221 = vmatprep.mubr.f32.mxu0 0.0
    %222 = vmatmul.mubr.f32.gmra.mxu0 %v71
    %v223 = vpop.f32.mrf.mxu0
    %v224 = vadd.f32 %v67, %v223
    %v225 = vpop.f32.mrf.mxu0
    %v226 = vadd.f32 %v68, %v225
    %227 = vdwg.mxu0
    %v228 = vadd.f32 %v153, %v155
    %v229 = vadd.f32 %v228, %v224
    %vm230 = vcmask 64512
    %v231 = vsel %vm230, %v226, 0.0
    %v232 = vadd.f32 %v229, %v231
    %233 = vadd.xlane.f32.xlu0 %v232
    %v234 = vpop.xlane.xlu0 %233
    %v235 = vmul.f32 %v234, 0.0025510204
    %v236 = vmul.f32 %v153, %v153
    %v237 = vmul.f32 %v155, %v155
    %v238 = vmul.f32 %v224, %v224
    %v239 = vmul.f32 %v226, %v226
    %v240 = vadd.f32 %v236, %v237
    %v241 = vadd.f32 %v240, %v238
    %v242 = vsel %vm230, %v239, 0.0
    %v243 = vadd.f32 %v241, %v242
    %244 = vadd.xlane.f32.xlu0 %v243
    %v245 = vpop.xlane.xlu0 %244
    %v246 = vmul.f32 %v245, 0.0025510204
    %v247 = vmul.f32 %v235, %v235
    %v248 = vsub.f32 %v246, %v247
    %v249 = vmax.f32 %v248, 0.0
    %v250 = vld [vmem:[%s3] sm:$0xff]
    %v251 = vadd.f32 %v249, 1e-05
    %v252 = vrsqrt.pop %v251
    %v253 = vmul.f32 %v250, %v252
    %v254 = vmul.f32 %v235, %v253
    %256 = vrot.lane.b32.xlu0 %v254, 1
    %v257 = vpop.permute.xlu0 %256
    %v259 = vsub.f32 %v250, %v257
    %261 = vset.pattern.permute.xlu0 0
    %262 = vperm.xlu0 %261, %v253
    %v263 = vpop.permute.xlu0 %262
    %v265 = vmul.f32 %v153, %v263
    %v266 = vmul.f32 %v155, %v263
    %v267 = vmul.f32 %v224, %v263
    %v268 = vmul.f32 %v226, %v263
    %270 = vset.pattern.permute.xlu0 1
    %271 = vperm.xlu0 %270, %v259
    %v272 = vpop.permute.xlu0 %271
    %v274 = vadd.f32 %v265, %v272
    %v275 = vadd.f32 %v266, %v272
    %v276 = vadd.f32 %v267, %v272
    %v277 = vadd.f32 %v268, %v272
    %v278 = vmax.f32 %v274, 0.0
    %v279 = vmax.f32 %v275, 0.0
    %v280 = vmax.f32 %v276, 0.0
    %v281 = vmax.f32 %v277, 0.0
    %282 = vst [vmem:[#allocation7] sm:$0xff] %v278
    %283 = vst [vmem:[#allocation7 + $0x8] sm:$0xff] %v279
    %284 = vst [vmem:[#allocation7 + $0x10] sm:$0xff] %v280
    %285 = vst.msk [vmem:[#allocation7 + $0x18] sm:$0xff] %vm230, %v281
    // Predicated region
    $region26: #{tpu_custom_call.1} parent=1 // pred_check
      _
    $region27: #{tpu_custom_call.1} parent=1 // pred_check_branch
      %287 = sbr.rel (0) target = $region29
    $region28: #{tpu_custom_call.1} parent=1 // pred_region
      %s289 = ssub.s32 512, 512
      %290 = vsyncadd [#allocation4], %s289
      %s292 = sshll.u32 [#allocation7], 4
      %s293 = int_to_ptr.vmem [resolvable:$true] %s292
      %295 = dma.vmem_to_hbm [thread:$0]  %s293, 512, %s4, [#allocation4]
    $region29: #{tpu_custom_call.1} parent=1 // pred_fallthru
      _
    // Predicated region
    $region30: #{tpu_custom_call.1} parent=1 // pred_check
      _
    $region31: #{tpu_custom_call.1} parent=1 // pred_check_branch
      %297 = sbr.rel (0) target = $region33
    $region32: #{tpu_custom_call.1} parent=1 // pred_region
      %298 = dma.done [#allocation4], 512
    $region33: #{tpu_custom_call.1} parent=1 // pred_fallthru
      _
    %299 = vsyncpa [#allocation3], 1
    %300 = vsyncpa [#allocation6], 1
    %301 = vsyncpa [#allocation4], 1

</llo_original>
